<compile_context>
chip_gen: v7x
topology: tpu7x:2x2x1
jax: 0.10.0
libtpu: 0.0.40
codegen_flags: <defaults>
</compile_context>

<pallas_src>
import numpy as np
import jax
import jax.numpy as jnp
from jax import lax
from jax.experimental import pallas as pl
from jax.experimental.pallas import tpu as pltpu


# 3x3 taps in (dy, dx) order matching the flattened OIHW weight layout.
_TAPS = tuple((dy, dx) for dy in (-1, 0, 1) for dx in (-1, 0, 1))


def _boundary_masks(H, W, num_sample):
    """(9, S*H*W) f32 masks implementing zero padding for each 3x3 tap.

    Built on the flat lane axis with `num_sample` images concatenated; any
    lane roll that crosses a sample boundary lands on an image border, so the
    same masks also kill cross-sample contamination.
    """
    HW = H * W
    L = num_sample * HW
    local = np.arange(L, dtype=np.int64) % HW
    hh = local // W
    ww = local % W
    out = np.ones((9, L), dtype=np.float32)
    for t, (dy, dx) in enumerate(_TAPS):
        ok = np.ones((L,), dtype=bool)
        if dy == -1:
            ok &= hh >= 1
        if dy == 1:
            ok &= hh <= H - 2
        if dx == -1:
            ok &= ww >= 1
        if dx == 1:
            ok &= ww <= W - 2
        out[t] = ok.astype(np.float32)
    return jnp.asarray(out)


# -----------------------------------------------------------------------------
# Fused DAE kernel.  Layout inside the kernel: (channels, S*H*W), lane-dense.
# -----------------------------------------------------------------------------
def _make_dae_kernel(H, W, num_sample, cin_real, compute_image, compute_loss):
    HW = H * W
    inv_s = 1.0 / float(num_sample)

    def kernel(mask_ref, noisy_ref, bmask_ref, w1_ref, b1_ref, w2_ref, b2_ref,
               *out_refs):
        it = iter(out_refs)
        out_ref = next(it) if compute_image else None
        num_ref = next(it) if compute_loss else None
        den_ref = next(it) if compute_loss else None

        noisy = noisy_ref[0]          # (Cin_pad, HW)
        keep = mask_ref[0]            # (Cin_pad, L)   L = S*HW
        bm = bmask_ref[...]           # (9, L)

        # Replicate the noisy image across the S lane segments, apply masks.
        if num_sample > 1:
            noisy_rep = jnp.concatenate([noisy] * num_sample, axis=1)
        else:
            noisy_rep = noisy
        x = noisy_rep * keep          # (Cin_pad, L)

        def im2col(v):
            """(Cv, L) -> (9*Cv, L): tap-major stack of shifted+masked taps."""
            taps = []
            for t, (dy, dx) in enumerate(_TAPS):
                off = dy * W + dx
                sv = jnp.roll(v, -off, axis=1) if off != 0 else v
                if (dy, dx) != (0, 0):
                    sv = sv * bm[t:t + 1, :]
                taps.append(sv)
            return jnp.concatenate(taps, axis=0)

        # conv1 (3x3, pad 1) + LeakyReLU(0.2): one MXU matmul.
        a1 = jnp.dot(w1_ref[...], im2col(x),
                     preferred_element_type=jnp.float32) + b1_ref[...]
        hid = jnp.maximum(a1, 0.2 * a1)            # (Ch, L)

        # conv2 (3x3, pad 1) + sigmoid: one MXU matmul.
        a2 = jnp.dot(w2_ref[...], im2col(hid),
                     preferred_element_type=jnp.float32) + b2_ref[...]
        denoised = 1.0 / (1.0 + jnp.exp(-a2))      # (Cout, L)

        if compute_image:
            # Average over the S lane segments (static slice sum).
            acc = denoised[:, 0:HW]
            for s in range(1, num_sample):
                acc = acc + denoised[:, s * HW:(s + 1) * HW]
            out_ref[0] = (acc * inv_s).astype(out_ref.dtype)

        if compute_loss:
            # Self-supervised loss partial sums over the REAL channels only
            # (padded channels are excluded).
            inv_mask = 1.0 - keep[:cin_real, :]
            r = (denoised[:cin_real, :] - noisy_rep[:cin_real, :]) * inv_mask
            num_ref[...] = jnp.full(num_ref.shape, jnp.sum(r * r), jnp.float32)
            den_ref[...] = jnp.full(den_ref.shape, jnp.sum(inv_mask), jnp.float32)

    return kernel


def _run_dae(noisy_flat, keep_mask, params, *, H, W, num_sample, cin_real,
             compute_image, compute_loss):
    """noisy_flat: (N, Cin_pad, H*W) f32.  keep_mask: (N, Cin_pad, S*H*W) f32."""
    w1, b1, w2, b2 = params
    N, cin_pad, HW = noisy_flat.shape
    L = num_sample * HW
    assert keep_mask.shape == (N, cin_pad, L)
    ch = w1.shape[0]
    cout = w2.shape[0]
    bmask = _boundary_masks(H, W, num_sample)

    kernel = _make_dae_kernel(H, W, num_sample, cin_real,
                              compute_image, compute_loss)

    in_specs = [
        pl.BlockSpec((1, cin_pad, L), lambda b: (b, 0, 0)),     # keep mask
        pl.BlockSpec((1, cin_pad, HW), lambda b: (b, 0, 0)),    # noisy image
        pl.BlockSpec((9, L), lambda b: (0, 0)),                 # boundary masks
        pl.BlockSpec((ch, 9 * cin_pad), lambda b: (0, 0)),      # w1
        pl.BlockSpec((ch, 1), lambda b: (0, 0)),                # b1
        pl.BlockSpec((cout, 9 * ch), lambda b: (0, 0)),         # w2
        pl.BlockSpec((cout, 1), lambda b: (0, 0)),              # b2
    ]

    out_shape = []
    out_specs = []
    if compute_image:
        out_shape.append(jax.ShapeDtypeStruct((N, cout, HW), jnp.float32))
        out_specs.append(pl.BlockSpec((1, cout, HW), lambda b: (b, 0, 0)))
    if compute_loss:
        out_shape.append(jax.ShapeDtypeStruct((N, 1, 128), jnp.float32))
        out_specs.append(pl.BlockSpec((1, 1, 128), lambda b: (b, 0, 0)))
        out_shape.append(jax.ShapeDtypeStruct((N, 1, 128), jnp.float32))
        out_specs.append(pl.BlockSpec((1, 1, 128), lambda b: (b, 0, 0)))

    outs = pl.pallas_call(
        kernel,
        out_shape=tuple(out_shape),
        grid=(N,),
        in_specs=in_specs,
        out_specs=tuple(out_specs),
        compiler_params=pltpu.CompilerParams(
            dimension_semantics=("parallel",)),
    )(keep_mask, noisy_flat, bmask, w1, b1, w2, b2)
    return outs


# -----------------------------------------------------------------------------
# Parameter init (xavier_normal_ with gain=0.02, zero bias — as in the module)
# -----------------------------------------------------------------------------
def _xavier_conv_oihw(key, cout, cin, kh=3, kw=3, gain=0.02):
    fan_in, fan_out = cin * kh * kw, cout * kh * kw
    std = gain * (2.0 / (fan_in + fan_out)) ** 0.5
    return std * jax.random.normal(key, (cout, cin, kh, kw), dtype=jnp.float32)


def _to_kernel_layout(w_oihw, cin_pad=None):
    """(O, I, 3, 3) -> (O, 9*I_pad): tap-major, channel-minor contraction axis."""
    co, ci, kh, kw = w_oihw.shape
    if cin_pad is not None and cin_pad > ci:
        w_oihw = jnp.pad(w_oihw, ((0, 0), (0, cin_pad - ci), (0, 0), (0, 0)))
        ci = cin_pad
    return jnp.transpose(w_oihw, (0, 2, 3, 1)).reshape(co, kh * kw * ci)


def _pad_channels(x, cpad):
    return jnp.pad(x, ((0, 0), (0, cpad - x.shape[1]), (0, 0)))


class Self2SelfPlusPallas:
    """Pallas stand-in for Self2SelfPlus.forward (train / inference modes)."""

    def __init__(self, key, cin=4, hidden=8, num_sample=4, p_drop=0.3,
                 lambda_perceptual=1.0, lambda_iqa=1.0):
        assert hidden % 8 == 0, "hidden channels kept a multiple of 8"
        k1, k2 = jax.random.split(key)
        self.cin = cin
        self.cin_pad = ((cin + 7) // 8) * 8          # sublane-aligned im2col
        self.hidden = hidden
        self.w1_oihw = _xavier_conv_oihw(k1, hidden, cin)
        self.w2_oihw = _xavier_conv_oihw(k2, cin, hidden)
        self.b1 = jnp.zeros((hidden, 1), jnp.float32)
        self.b2 = jnp.zeros((cin, 1), jnp.float32)
        self.w1 = _to_kernel_layout(self.w1_oihw, self.cin_pad)
        self.w2 = _to_kernel_layout(self.w2_oihw)
        self.num_sample = num_sample
        self.p_drop = p_drop
        self.lambda_perceptual = lambda_perceptual
        self.lambda_iqa = lambda_iqa

    @property
    def params(self):
        return (self.w1, self.b1, self.w2, self.b2)

    def forward(self, noisy_nchw, mode, key=None):
        if key is None:
            key = jax.random.PRNGKey(1)
        N, C, H, W = noisy_nchw.shape
        HW = H * W
        noisy_flat = _pad_channels(
            noisy_nchw.reshape(N, C, HW).astype(jnp.float32), self.cin_pad)
        keep_prob = 1.0 - self.p_drop

        if mode == 'train':
            # One sample per image (matches computeLoss -> denoiseImage once).
            keep = jax.random.bernoulli(
                key, keep_prob, (N, self.cin_pad, HW)).astype(jnp.float32)
            num, den = _run_dae(noisy_flat, keep, self.params,
                                H=H, W=W, num_sample=1, cin_real=C,
                                compute_image=False, compute_loss=True)
            loss = {}
            loss['Self-Supervised'] = (jnp.sum(num[:, 0, 0]) /
                                       jnp.maximum(jnp.sum(den[:, 0, 0]), 1e-6))
            # TODO(synk): 'Perceptual' (pretrained VGG) and 'IQA' losses require
            #             external networks not in the provided source; omitted.
            return loss
        elif mode == 'inference':
            S = self.num_sample
            keep = jax.random.bernoulli(
                key, keep_prob, (N, self.cin_pad, S * HW)).astype(jnp.float32)
            outs = _run_dae(noisy_flat, keep, self.params,
                            H=H, W=W, num_sample=S, cin_real=C,
                            compute_image=True, compute_loss=False)
            return outs[0].reshape(N, C, H, W)       # averaged, already NCHW
        else:
            raise NotImplementedError(f'{mode} is not supported')


if __name__ == "__main__":
    key = jax.random.PRNGKey(0)
    k_param, k_data, k_fwd, kc1, kc2, kc3, kc4 = jax.random.split(key, 7)

    # Small shapes consistent with the module's conv-net forward: NCHW input.
    x_nchw = jax.random.uniform(k_data, (2, 4, 16, 16), dtype=jnp.float32)
    N, C, H, W = x_nchw.shape
    HW = H * W

    model = Self2SelfPlusPallas(k_param, cin=4, hidden=8, num_sample=4, p_drop=0.3)

    # --- correctness check of the fused conv path against XLA (mask = ones) ---
    def ref_dae(x, w1, b1, w2, b2):
        dn = ('NCHW', 'OIHW', 'NCHW')
        y = lax.conv_general_dilated(x, w1, (1, 1), 'SAME', dimension_numbers=dn)
        y = y + b1.reshape(1, -1, 1, 1)
        y = jnp.maximum(y, 0.2 * y)
        z = lax.conv_general_dilated(y, w2, (1, 1), 'SAME', dimension_numbers=dn)
        z = z + b2.reshape(1, -1, 1, 1)
        return 1.0 / (1.0 + jnp.exp(-z))

    cw1 = 0.25 * jax.random.normal(kc1, (8, 4, 3, 3), jnp.float32)
    cb1 = 0.05 * jax.random.normal(kc2, (8, 1), jnp.float32)
    cw2 = 0.25 * jax.random.normal(kc3, (4, 8, 3, 3), jnp.float32)
    cb2 = 0.05 * jax.random.normal(kc4, (4, 1), jnp.float32)
    chk_params = (_to_kernel_layout(cw1, model.cin_pad), cb1,
                  _to_kernel_layout(cw2), cb2)
    x_flat_pad = _pad_channels(x_nchw.reshape(N, C, HW), model.cin_pad)
    ones_mask = jnp.ones((N, model.cin_pad, HW), jnp.float32)
    outs = _run_dae(x_flat_pad, ones_mask, chk_params,
                    H=H, W=W, num_sample=1, cin_real=C,
                    compute_image=True, compute_loss=False)
    out_chk = outs[0].reshape(N, C, H, W)
    ref = ref_dae(x_nchw, cw1, cb1, cw2, cb2)
    assert bool(jnp.allclose(out_chk, ref, atol=1e-2, rtol=1e-2)), \
        "Pallas conv path mismatch"

    # --- module forward: train and inference modes ---
    loss = model.forward(x_nchw, 'train', key=k_fwd)
    out = model.forward(x_nchw, 'inference', key=k_fwd)

    jax.block_until_ready((loss['Self-Supervised'], out))
    assert out.shape == x_nchw.shape
    assert bool(jnp.isfinite(loss['Self-Supervised']))
    assert bool(jnp.all(jnp.isfinite(out)))
    print("KERNEL_OK")
</pallas_src>

<mosaic_0001>
module attributes {stable_mosaic.version = 11 : i64} {
  func.func @kernel(%arg0: i32, %arg1: memref<1x8x256xf32, #tpu.memory_space<vmem>>, %arg2: memref<1x8x256xf32, #tpu.memory_space<vmem>>, %arg3: memref<9x256xf32, #tpu.memory_space<vmem>>, %arg4: memref<8x72xf32, #tpu.memory_space<vmem>>, %arg5: memref<8x1xf32, #tpu.memory_space<vmem>>, %arg6: memref<4x72xf32, #tpu.memory_space<vmem>>, %arg7: memref<4x1xf32, #tpu.memory_space<vmem>>, %arg8: memref<1x4x256xf32, #tpu.memory_space<vmem>>) attributes {dimension_semantics = [#tpu.dimension_semantics<parallel>], iteration_bounds = array<i64: 2>, scalar_prefetch = 0 : i64, scratch_operands = 0 : i64, tpu.core_type = #tpu.core_type<tc>, window_params = [{transform_indices = @transform_0, window_bounds = array<i64: 1, 8, 256>}, {transform_indices = @transform_1, window_bounds = array<i64: 1, 8, 256>}, {pipeline_mode = #tpu.pipeline_mode<synchronous>, transform_indices = @transform_2, window_bounds = array<i64: 9, 256>}, {pipeline_mode = #tpu.pipeline_mode<synchronous>, transform_indices = @transform_3, window_bounds = array<i64: 8, 72>}, {pipeline_mode = #tpu.pipeline_mode<synchronous>, transform_indices = @transform_4, window_bounds = array<i64: 8, 1>}, {pipeline_mode = #tpu.pipeline_mode<synchronous>, transform_indices = @transform_5, window_bounds = array<i64: 4, 72>}, {pipeline_mode = #tpu.pipeline_mode<synchronous>, transform_indices = @transform_6, window_bounds = array<i64: 4, 1>}, {transform_indices = @transform_7, window_bounds = array<i64: 1, 4, 256>}]} {
    %c0 = arith.constant 0 : index
    %c0_0 = arith.constant 0 : index
    %c0_1 = arith.constant 0 : index
    %0 = vector.load %arg2[%c0, %c0_0, %c0_1] : memref<1x8x256xf32, #tpu.memory_space<vmem>>, vector<1x8x256xf32>
    %1 = vector.shape_cast %0 : vector<1x8x256xf32> to vector<8x256xf32>
    %c0_2 = arith.constant 0 : index
    %c0_3 = arith.constant 0 : index
    %c0_4 = arith.constant 0 : index
    %2 = vector.load %arg1[%c0_2, %c0_3, %c0_4] : memref<1x8x256xf32, #tpu.memory_space<vmem>>, vector<1x8x256xf32>
    %3 = vector.shape_cast %2 : vector<1x8x256xf32> to vector<8x256xf32>
    %c0_5 = arith.constant 0 : index
    %c0_6 = arith.constant 0 : index
    %4 = vector.load %arg3[%c0_5, %c0_6] : memref<9x256xf32, #tpu.memory_space<vmem>>, vector<9x256xf32>
    %5 = arith.mulf %1, %3 : vector<8x256xf32>
    %c0_7 = arith.constant 0 : index
    %c0_8 = arith.constant 0 : index
    %6 = vector.load %arg4[%c0_7, %c0_8] : memref<8x72xf32, #tpu.memory_space<vmem>>, vector<8x72xf32>
    %7 = vector.extract_strided_slice %5 {offsets = [0, 239], sizes = [8, 17], strides = [1, 1]} : vector<8x256xf32> to vector<8x17xf32>
    %8 = vector.extract_strided_slice %5 {offsets = [0, 0], sizes = [8, 239], strides = [1, 1]} : vector<8x256xf32> to vector<8x239xf32>
    %9 = tpu.concatenate %7, %8 in 1 : vector<8x17xf32>, vector<8x239xf32> -> vector<8x256xf32>
    %10 = vector.extract_strided_slice %4 {offsets = [0, 0], sizes = [1, 256], strides = [1, 1]} : vector<9x256xf32> to vector<1x256xf32>
    %11 = vector.broadcast %10 : vector<1x256xf32> to vector<8x256xf32>
    %12 = arith.mulf %9, %11 : vector<8x256xf32>
    %13 = vector.extract_strided_slice %5 {offsets = [0, 240], sizes = [8, 16], strides = [1, 1]} : vector<8x256xf32> to vector<8x16xf32>
    %14 = vector.extract_strided_slice %5 {offsets = [0, 0], sizes = [8, 240], strides = [1, 1]} : vector<8x256xf32> to vector<8x240xf32>
    %15 = tpu.concatenate %13, %14 in 1 : vector<8x16xf32>, vector<8x240xf32> -> vector<8x256xf32>
    %16 = vector.extract_strided_slice %4 {offsets = [1, 0], sizes = [1, 256], strides = [1, 1]} : vector<9x256xf32> to vector<1x256xf32>
    %17 = vector.broadcast %16 : vector<1x256xf32> to vector<8x256xf32>
    %18 = arith.mulf %15, %17 : vector<8x256xf32>
    %19 = vector.extract_strided_slice %5 {offsets = [0, 241], sizes = [8, 15], strides = [1, 1]} : vector<8x256xf32> to vector<8x15xf32>
    %20 = vector.extract_strided_slice %5 {offsets = [0, 0], sizes = [8, 241], strides = [1, 1]} : vector<8x256xf32> to vector<8x241xf32>
    %21 = tpu.concatenate %19, %20 in 1 : vector<8x15xf32>, vector<8x241xf32> -> vector<8x256xf32>
    %22 = vector.extract_strided_slice %4 {offsets = [2, 0], sizes = [1, 256], strides = [1, 1]} : vector<9x256xf32> to vector<1x256xf32>
    %23 = vector.broadcast %22 : vector<1x256xf32> to vector<8x256xf32>
    %24 = arith.mulf %21, %23 : vector<8x256xf32>
    %25 = vector.extract_strided_slice %5 {offsets = [0, 255], sizes = [8, 1], strides = [1, 1]} : vector<8x256xf32> to vector<8x1xf32>
    %26 = vector.extract_strided_slice %5 {offsets = [0, 0], sizes = [8, 255], strides = [1, 1]} : vector<8x256xf32> to vector<8x255xf32>
    %27 = tpu.concatenate %25, %26 in 1 : vector<8x1xf32>, vector<8x255xf32> -> vector<8x256xf32>
    %28 = vector.extract_strided_slice %4 {offsets = [3, 0], sizes = [1, 256], strides = [1, 1]} : vector<9x256xf32> to vector<1x256xf32>
    %29 = vector.broadcast %28 : vector<1x256xf32> to vector<8x256xf32>
    %30 = arith.mulf %27, %29 : vector<8x256xf32>
    %31 = vector.extract_strided_slice %5 {offsets = [0, 1], sizes = [8, 255], strides = [1, 1]} : vector<8x256xf32> to vector<8x255xf32>
    %32 = vector.extract_strided_slice %5 {offsets = [0, 0], sizes = [8, 1], strides = [1, 1]} : vector<8x256xf32> to vector<8x1xf32>
    %33 = tpu.concatenate %31, %32 in 1 : vector<8x255xf32>, vector<8x1xf32> -> vector<8x256xf32>
    %34 = vector.extract_strided_slice %4 {offsets = [5, 0], sizes = [1, 256], strides = [1, 1]} : vector<9x256xf32> to vector<1x256xf32>
    %35 = vector.broadcast %34 : vector<1x256xf32> to vector<8x256xf32>
    %36 = arith.mulf %33, %35 : vector<8x256xf32>
    %37 = vector.extract_strided_slice %5 {offsets = [0, 15], sizes = [8, 241], strides = [1, 1]} : vector<8x256xf32> to vector<8x241xf32>
    %38 = vector.extract_strided_slice %5 {offsets = [0, 0], sizes = [8, 15], strides = [1, 1]} : vector<8x256xf32> to vector<8x15xf32>
    %39 = tpu.concatenate %37, %38 in 1 : vector<8x241xf32>, vector<8x15xf32> -> vector<8x256xf32>
    %40 = vector.extract_strided_slice %4 {offsets = [6, 0], sizes = [1, 256], strides = [1, 1]} : vector<9x256xf32> to vector<1x256xf32>
    %41 = vector.broadcast %40 : vector<1x256xf32> to vector<8x256xf32>
    %42 = arith.mulf %39, %41 : vector<8x256xf32>
    %43 = vector.extract_strided_slice %5 {offsets = [0, 16], sizes = [8, 240], strides = [1, 1]} : vector<8x256xf32> to vector<8x240xf32>
    %44 = vector.extract_strided_slice %5 {offsets = [0, 0], sizes = [8, 16], strides = [1, 1]} : vector<8x256xf32> to vector<8x16xf32>
    %45 = tpu.concatenate %43, %44 in 1 : vector<8x240xf32>, vector<8x16xf32> -> vector<8x256xf32>
    %46 = vector.extract_strided_slice %4 {offsets = [7, 0], sizes = [1, 256], strides = [1, 1]} : vector<9x256xf32> to vector<1x256xf32>
    %47 = vector.broadcast %46 : vector<1x256xf32> to vector<8x256xf32>
    %48 = arith.mulf %45, %47 : vector<8x256xf32>
    %49 = vector.extract_strided_slice %5 {offsets = [0, 17], sizes = [8, 239], strides = [1, 1]} : vector<8x256xf32> to vector<8x239xf32>
    %50 = vector.extract_strided_slice %5 {offsets = [0, 0], sizes = [8, 17], strides = [1, 1]} : vector<8x256xf32> to vector<8x17xf32>
    %51 = tpu.concatenate %49, %50 in 1 : vector<8x239xf32>, vector<8x17xf32> -> vector<8x256xf32>
    %52 = vector.extract_strided_slice %4 {offsets = [8, 0], sizes = [1, 256], strides = [1, 1]} : vector<9x256xf32> to vector<1x256xf32>
    %53 = vector.broadcast %52 : vector<1x256xf32> to vector<8x256xf32>
    %54 = arith.mulf %51, %53 : vector<8x256xf32>
    %55 = tpu.concatenate %12, %18, %24, %30, %5, %36, %42, %48, %54 in 0 : vector<8x256xf32>, vector<8x256xf32>, vector<8x256xf32>, vector<8x256xf32>, vector<8x256xf32>, vector<8x256xf32>, vector<8x256xf32>, vector<8x256xf32>, vector<8x256xf32> -> vector<72x256xf32>
    %cst = arith.constant dense<0.000000e+00> : vector<8x256xf32>
    %56 = tpu.matmul %6, %55, %cst {dimension_numbers = #tpu.dot_dimension_numbers<[1], [0], [0], [1], [0, 0, 1, 1], [], []>} : vector<8x72xf32>, vector<72x256xf32>, vector<8x256xf32> -> vector<8x256xf32>
    %c0_9 = arith.constant 0 : index
    %c0_10 = arith.constant 0 : index
    %57 = vector.load %arg5[%c0_9, %c0_10] : memref<8x1xf32, #tpu.memory_space<vmem>>, vector<8x1xf32>
    %58 = vector.broadcast %57 : vector<8x1xf32> to vector<8x256xf32>
    %59 = arith.addf %56, %58 : vector<8x256xf32>
    %cst_11 = arith.constant 2.000000e-01 : f32
    %60 = vector.broadcast %cst_11 : f32 to vector<8x256xf32>
    %61 = arith.mulf %60, %59 : vector<8x256xf32>
    %62 = arith.maximumf %59, %61 : vector<8x256xf32>
    %c0_12 = arith.constant 0 : index
    %c0_13 = arith.constant 0 : index
    %63 = vector.load %arg6[%c0_12, %c0_13] : memref<4x72xf32, #tpu.memory_space<vmem>>, vector<4x72xf32>
    %64 = vector.extract_strided_slice %62 {offsets = [0, 239], sizes = [8, 17], strides = [1, 1]} : vector<8x256xf32> to vector<8x17xf32>
    %65 = vector.extract_strided_slice %62 {offsets = [0, 0], sizes = [8, 239], strides = [1, 1]} : vector<8x256xf32> to vector<8x239xf32>
    %66 = tpu.concatenate %64, %65 in 1 : vector<8x17xf32>, vector<8x239xf32> -> vector<8x256xf32>
    %67 = vector.extract_strided_slice %4 {offsets = [0, 0], sizes = [1, 256], strides = [1, 1]} : vector<9x256xf32> to vector<1x256xf32>
    %68 = vector.broadcast %67 : vector<1x256xf32> to vector<8x256xf32>
    %69 = arith.mulf %66, %68 : vector<8x256xf32>
    %70 = vector.extract_strided_slice %62 {offsets = [0, 240], sizes = [8, 16], strides = [1, 1]} : vector<8x256xf32> to vector<8x16xf32>
    %71 = vector.extract_strided_slice %62 {offsets = [0, 0], sizes = [8, 240], strides = [1, 1]} : vector<8x256xf32> to vector<8x240xf32>
    %72 = tpu.concatenate %70, %71 in 1 : vector<8x16xf32>, vector<8x240xf32> -> vector<8x256xf32>
    %73 = vector.extract_strided_slice %4 {offsets = [1, 0], sizes = [1, 256], strides = [1, 1]} : vector<9x256xf32> to vector<1x256xf32>
    %74 = vector.broadcast %73 : vector<1x256xf32> to vector<8x256xf32>
    %75 = arith.mulf %72, %74 : vector<8x256xf32>
    %76 = vector.extract_strided_slice %62 {offsets = [0, 241], sizes = [8, 15], strides = [1, 1]} : vector<8x256xf32> to vector<8x15xf32>
    %77 = vector.extract_strided_slice %62 {offsets = [0, 0], sizes = [8, 241], strides = [1, 1]} : vector<8x256xf32> to vector<8x241xf32>
    %78 = tpu.concatenate %76, %77 in 1 : vector<8x15xf32>, vector<8x241xf32> -> vector<8x256xf32>
    %79 = vector.extract_strided_slice %4 {offsets = [2, 0], sizes = [1, 256], strides = [1, 1]} : vector<9x256xf32> to vector<1x256xf32>
    %80 = vector.broadcast %79 : vector<1x256xf32> to vector<8x256xf32>
    %81 = arith.mulf %78, %80 : vector<8x256xf32>
    %82 = vector.extract_strided_slice %62 {offsets = [0, 255], sizes = [8, 1], strides = [1, 1]} : vector<8x256xf32> to vector<8x1xf32>
    %83 = vector.extract_strided_slice %62 {offsets = [0, 0], sizes = [8, 255], strides = [1, 1]} : vector<8x256xf32> to vector<8x255xf32>
    %84 = tpu.concatenate %82, %83 in 1 : vector<8x1xf32>, vector<8x255xf32> -> vector<8x256xf32>
    %85 = vector.extract_strided_slice %4 {offsets = [3, 0], sizes = [1, 256], strides = [1, 1]} : vector<9x256xf32> to vector<1x256xf32>
    %86 = vector.broadcast %85 : vector<1x256xf32> to vector<8x256xf32>
    %87 = arith.mulf %84, %86 : vector<8x256xf32>
    %88 = vector.extract_strided_slice %62 {offsets = [0, 1], sizes = [8, 255], strides = [1, 1]} : vector<8x256xf32> to vector<8x255xf32>
    %89 = vector.extract_strided_slice %62 {offsets = [0, 0], sizes = [8, 1], strides = [1, 1]} : vector<8x256xf32> to vector<8x1xf32>
    %90 = tpu.concatenate %88, %89 in 1 : vector<8x255xf32>, vector<8x1xf32> -> vector<8x256xf32>
    %91 = vector.extract_strided_slice %4 {offsets = [5, 0], sizes = [1, 256], strides = [1, 1]} : vector<9x256xf32> to vector<1x256xf32>
    %92 = vector.broadcast %91 : vector<1x256xf32> to vector<8x256xf32>
    %93 = arith.mulf %90, %92 : vector<8x256xf32>
    %94 = vector.extract_strided_slice %62 {offsets = [0, 15], sizes = [8, 241], strides = [1, 1]} : vector<8x256xf32> to vector<8x241xf32>
    %95 = vector.extract_strided_slice %62 {offsets = [0, 0], sizes = [8, 15], strides = [1, 1]} : vector<8x256xf32> to vector<8x15xf32>
    %96 = tpu.concatenate %94, %95 in 1 : vector<8x241xf32>, vector<8x15xf32> -> vector<8x256xf32>
    %97 = vector.extract_strided_slice %4 {offsets = [6, 0], sizes = [1, 256], strides = [1, 1]} : vector<9x256xf32> to vector<1x256xf32>
    %98 = vector.broadcast %97 : vector<1x256xf32> to vector<8x256xf32>
    %99 = arith.mulf %96, %98 : vector<8x256xf32>
    %100 = vector.extract_strided_slice %62 {offsets = [0, 16], sizes = [8, 240], strides = [1, 1]} : vector<8x256xf32> to vector<8x240xf32>
    %101 = vector.extract_strided_slice %62 {offsets = [0, 0], sizes = [8, 16], strides = [1, 1]} : vector<8x256xf32> to vector<8x16xf32>
    %102 = tpu.concatenate %100, %101 in 1 : vector<8x240xf32>, vector<8x16xf32> -> vector<8x256xf32>
    %103 = vector.extract_strided_slice %4 {offsets = [7, 0], sizes = [1, 256], strides = [1, 1]} : vector<9x256xf32> to vector<1x256xf32>
    %104 = vector.broadcast %103 : vector<1x256xf32> to vector<8x256xf32>
    %105 = arith.mulf %102, %104 : vector<8x256xf32>
    %106 = vector.extract_strided_slice %62 {offsets = [0, 17], sizes = [8, 239], strides = [1, 1]} : vector<8x256xf32> to vector<8x239xf32>
    %107 = vector.extract_strided_slice %62 {offsets = [0, 0], sizes = [8, 17], strides = [1, 1]} : vector<8x256xf32> to vector<8x17xf32>
    %108 = tpu.concatenate %106, %107 in 1 : vector<8x239xf32>, vector<8x17xf32> -> vector<8x256xf32>
    %109 = vector.extract_strided_slice %4 {offsets = [8, 0], sizes = [1, 256], strides = [1, 1]} : vector<9x256xf32> to vector<1x256xf32>
    %110 = vector.broadcast %109 : vector<1x256xf32> to vector<8x256xf32>
    %111 = arith.mulf %108, %110 : vector<8x256xf32>
    %112 = tpu.concatenate %69, %75, %81, %87, %62, %93, %99, %105, %111 in 0 : vector<8x256xf32>, vector<8x256xf32>, vector<8x256xf32>, vector<8x256xf32>, vector<8x256xf32>, vector<8x256xf32>, vector<8x256xf32>, vector<8x256xf32>, vector<8x256xf32> -> vector<72x256xf32>
    %cst_14 = arith.constant dense<0.000000e+00> : vector<4x256xf32>
    %113 = tpu.matmul %63, %112, %cst_14 {dimension_numbers = #tpu.dot_dimension_numbers<[1], [0], [0], [1], [0, 0, 1, 1], [], []>} : vector<4x72xf32>, vector<72x256xf32>, vector<4x256xf32> -> vector<4x256xf32>
    %c0_15 = arith.constant 0 : index
    %c0_16 = arith.constant 0 : index
    %114 = vector.load %arg7[%c0_15, %c0_16] : memref<4x1xf32, #tpu.memory_space<vmem>>, vector<4x1xf32>
    %115 = vector.broadcast %114 : vector<4x1xf32> to vector<4x256xf32>
    %116 = arith.addf %113, %115 : vector<4x256xf32>
    %cst_17 = arith.constant 0.000000e+00 : f32
    %117 = vector.broadcast %cst_17 : f32 to vector<4x256xf32>
    %118 = arith.subf %117, %116 : vector<4x256xf32>
    %119 = math.exp %118 : vector<4x256xf32>
    %cst_18 = arith.constant 1.000000e+00 : f32
    %120 = vector.broadcast %cst_18 : f32 to vector<4x256xf32>
    %121 = arith.addf %120, %119 : vector<4x256xf32>
    %cst_19 = arith.constant 1.000000e+00 : f32
    %122 = vector.broadcast %cst_19 : f32 to vector<4x256xf32>
    %123 = arith.divf %122, %121 : vector<4x256xf32>
    %cst_20 = arith.constant 1.000000e+00 : f32
    %124 = vector.broadcast %cst_20 : f32 to vector<4x256xf32>
    %125 = arith.mulf %123, %124 : vector<4x256xf32>
    %c0_21 = arith.constant 0 : index
    %c0_22 = arith.constant 0 : index
    %c0_23 = arith.constant 0 : index
    %126 = vector.load %arg8[%c0_21, %c0_22, %c0_23] : memref<1x4x256xf32, #tpu.memory_space<vmem>>, vector<1x4x256xf32>
    %127 = vector.shape_cast %126 : vector<1x4x256xf32> to vector<4x256xf32>
    %128 = vector.shape_cast %125 : vector<4x256xf32> to vector<1x4x256xf32>
    tpu.vector_store %arg8[%c0_21, %c0_22, %c0_23], %128 {strides = array<i32>} : memref<1x4x256xf32, #tpu.memory_space<vmem>>, vector<1x4x256xf32>,
    return
  }
  func.func @transform_0(%arg0: i32) -> (i32, i32, i32) {
    %c0_i32 = arith.constant 0 : i32
    %c0_i32_0 = arith.constant 0 : i32
    %c0_i32_1 = arith.constant 0 : i32
    return %arg0, %c0_i32, %c0_i32_0 : i32, i32, i32
  }
  func.func @transform_1(%arg0: i32) -> (i32, i32, i32) {
    %c0_i32 = arith.constant 0 : i32
    %c0_i32_0 = arith.constant 0 : i32
    %c0_i32_1 = arith.constant 0 : i32
    return %arg0, %c0_i32, %c0_i32_0 : i32, i32, i32
  }
  func.func @transform_2(%arg0: i32) -> (i32, i32) {
    %c0_i32 = arith.constant 0 : i32
    %c0_i32_0 = arith.constant 0 : i32
    %c0_i32_1 = arith.constant 0 : i32
    return %c0_i32, %c0_i32_0 : i32, i32
  }
  func.func @transform_3(%arg0: i32) -> (i32, i32) {
    %c0_i32 = arith.constant 0 : i32
    %c0_i32_0 = arith.constant 0 : i32
    %c0_i32_1 = arith.constant 0 : i32
    return %c0_i32, %c0_i32_0 : i32, i32
  }
  func.func @transform_4(%arg0: i32) -> (i32, i32) {
    %c0_i32 = arith.constant 0 : i32
    %c0_i32_0 = arith.constant 0 : i32
    %c0_i32_1 = arith.constant 0 : i32
    return %c0_i32, %c0_i32_0 : i32, i32
  }
  func.func @transform_5(%arg0: i32) -> (i32, i32) {
    %c0_i32 = arith.constant 0 : i32
    %c0_i32_0 = arith.constant 0 : i32
    %c0_i32_1 = arith.constant 0 : i32
    return %c0_i32, %c0_i32_0 : i32, i32
  }
  func.func @transform_6(%arg0: i32) -> (i32, i32) {
    %c0_i32 = arith.constant 0 : i32
    %c0_i32_0 = arith.constant 0 : i32
    %c0_i32_1 = arith.constant 0 : i32
    return %c0_i32, %c0_i32_0 : i32, i32
  }
  func.func @transform_7(%arg0: i32) -> (i32, i32, i32) {
    %c0_i32 = arith.constant 0 : i32
    %c0_i32_0 = arith.constant 0 : i32
    %c0_i32_1 = arith.constant 0 : i32
    return %arg0, %c0_i32, %c0_i32_0 : i32, i32, i32
  }
}

</mosaic_0001>

<llo_original>
// kernel: tpu_custom_call.1
$region0: #{tpu_custom_call.1}
  #allocation0 [shape = 'u32[]', space=smem, size = 0x4, offset = 0x4, fixed_abs, tag = 'smem constant byte address 0x4 - core index']
  #allocation1 [shape = 'u32[144,128]{1,0:T(1,128)}', space=vmem, size = 0x12000, scoped, tag = 'internal scratch']
  %s0 = inlined_call_operand.hbm [shape: f32[2,8,256], index: 0, kind: input, shape index: {}]
  %s1 = inlined_call_operand.hbm [shape: f32[2,8,256], index: 1, kind: input, shape index: {}]
  %s2 = inlined_call_operand.hbm [shape: f32[9,256], index: 2, kind: input, shape index: {}]
  %s3 = inlined_call_operand.vmem [shape: f32[8,72], index: 3, kind: input, shape index: {}]
  %s4 = inlined_call_operand.vmem [shape: f32[8,1], index: 4, kind: input, shape index: {}]
  %s5 = inlined_call_operand.vmem [shape: f32[4,72], index: 5, kind: input, shape index: {}]
  %s6 = inlined_call_operand.vmem [shape: f32[4,1], index: 6, kind: input, shape index: {}]
  %s7 = inlined_call_operand.hbm [shape: f32[2,4,256], index: 7, kind: output, shape index: {}]
  %s8 = sld [smem:[#allocation0]]
  $region73: #{tpu_custom_call.1} parent=0
    _
  %s10 = ssub.s32 1, %s8
  %s11 = scalar_select 0, %s10, %s8
  $region1: #{tpu_custom_call.1} parent=0
    #allocation2 [shape = 'u8[16384]{0}', space=vmem, size = 0x4000, scoped, tag = 'input window, operand 0']
    #allocation3 [shape = 's32[2]{0}', space=sflag, size = 0x8, scoped, tag = 'scoped memory for tpu_custom_call.1']
    #allocation4 [shape = 's32[2]{0}', space=sflag, size = 0x8, scoped, tag = 'scoped memory for tpu_custom_call.1']
    #allocation5 [shape = 'u8[16384]{0}', space=vmem, size = 0x4000, scoped, tag = 'input window, operand 1']
    #allocation6 [shape = 's32[2]{0}', space=sflag, size = 0x8, scoped, tag = 'scoped memory for tpu_custom_call.1']
    #allocation7 [shape = 'u8[16384]{0}', space=vmem, size = 0x4000, scoped, tag = 'input window, operand 2, single buffered']
    #allocation8 [shape = 'u8[8192]{0}', space=vmem, size = 0x2000, scoped, tag = 'output window, operand 0']
    %12 = vsyncpa [#allocation3], 0
    %s13 = scalar_lea.sflag [#allocation3], 1
    %14 = vsyncpa %s13, 0
    %15 = vsyncpa [#allocation6], 0
    %s16 = scalar_lea.sflag [#allocation6], 1
    %17 = vsyncpa %s16, 0
    %18 = vsyncpa [#allocation4], 0
    %s19 = scalar_lea.sflag [#allocation4], 1
    %20 = vsyncpa %s19, 0
    loop: start=0, step=1, limit=4
    $region2: #{tpu_custom_call.1} parent=1 // loop_pre_header
      _
    $region3: #{tpu_custom_call.1} parent=1 // loop_header
      %s22 = sphi 0, %s26
      %p23 = scmp.ge.s32.totalorder %s22, 4
      %s32 = sphi 0, %s34
      %s35 = sphi 0, %s32
      %s36 = sphi 0, %s35
      %s52 = sphi 0, %s36
      %s58 = sphi 0, %s60
      %s61 = sphi 0, %s58
      %s62 = sphi 0, %s61
      %s78 = sphi 0, %s62
      %s82 = sphi 0, %s82
      %s84 = sphi 0, %s82
      %s85 = sphi 0, %s84
      %s99 = sphi 0, %s85
      %s103 = sphi 0, %s103
      %s105 = sphi 0, %s103
      %s106 = sphi 0, %s105
      %s120 = sphi 0, %s106
      %s124 = sphi 0, %s124
      %s126 = sphi 0, %s124
      %s127 = sphi 0, %s126
      %s141 = sphi 0, %s127
      %s145 = sphi 0, %s145
      %s147 = sphi 0, %s145
      %s148 = sphi 0, %s147
      %s162 = sphi 0, %s148
      %s166 = sphi 0, %s166
      %s168 = sphi 0, %s166
      %s169 = sphi 0, %s168
      %s183 = sphi 0, %s169
      %s189 = sphi 0, %s191
      %s192 = sphi 0, %s189
      %s193 = sphi 0, %s192
      %s209 = sphi 0, %s193
    $region4: #{tpu_custom_call.1} parent=1 // loop_header_branch
      %25 = sbr.rel (%p23) target = $region8
    $region5: #{tpu_custom_call.1} parent=1 // loop_body
      %s27 = ssub.s32 %s22, 1
      %s28 = ssub.s32 %s22, 2
      %s29 = sadd.s32 %s22, 1
      %s30 = ssub.s32 %s22, %s29
      %p31 = scmp.eq.s32.totalorder %s30, 0
      %s33 = sadd.s32 %s32, 1
      %s34 = scalar_select %p31, %s32, %s33
      %p37 = pneg %p31
      %p38 = scmp.eq.s32.totalorder %s22, 1
      %p39 = por %p37, %p38
      %p40 = scmp.ne.s32.totalorder %s32, %s35
      %p41 = scmp.eq.s32.totalorder %s22, 0
      %p42 = por %p40, %p41
      %p43 = scmp.ne.s32.totalorder %s32, %s35
      %p44 = scmp.eq.s32.totalorder %s27, 1
      %p45 = por %p43, %p44
      %p46 = scmp.ne.s32.totalorder %s35, %s36
      %p47 = scmp.eq.s32.totalorder %s27, 0
      %p48 = por %p46, %p47
      %p49 = scmp.ne.s32.totalorder %s35, %s36
      %p50 = scmp.eq.s32.totalorder %s28, 1
      %p51 = por %p49, %p50
      %p53 = scmp.ne.s32.totalorder %s36, %s52
      %p54 = scmp.eq.s32.totalorder %s28, 0
      %p55 = por %p53, %p54
      %s56 = ssub.s32 %s22, %s29
      %p57 = scmp.eq.s32.totalorder %s56, 0
      %s59 = sadd.s32 %s58, 1
      %s60 = scalar_select %p57, %s58, %s59
      %p63 = pneg %p57
      %p64 = scmp.eq.s32.totalorder %s22, 1
      %p65 = por %p63, %p64
      %p66 = scmp.ne.s32.totalorder %s58, %s61
      %p67 = scmp.eq.s32.totalorder %s22, 0
      %p68 = por %p66, %p67
      %p69 = scmp.ne.s32.totalorder %s58, %s61
      %p70 = scmp.eq.s32.totalorder %s27, 1
      %p71 = por %p69, %p70
      %p72 = scmp.ne.s32.totalorder %s61, %s62
      %p73 = scmp.eq.s32.totalorder %s27, 0
      %p74 = por %p72, %p73
      %p75 = scmp.ne.s32.totalorder %s61, %s62
      %p76 = scmp.eq.s32.totalorder %s28, 1
      %p77 = por %p75, %p76
      %p79 = scmp.ne.s32.totalorder %s62, %s78
      %p80 = scmp.eq.s32.totalorder %s28, 0
      %p81 = por %p79, %p80
      %s83 = sadd.s32 %s82, 1
      %p86 = scmp.eq.s32.totalorder %s22, 1
      %p87 = scmp.ne.s32.totalorder %s82, %s84
      %p88 = scmp.eq.s32.totalorder %s22, 0
      %p89 = por %p87, %p88
      %p90 = scmp.ne.s32.totalorder %s82, %s84
      %p91 = scmp.eq.s32.totalorder %s27, 1
      %p92 = por %p90, %p91
      %p93 = scmp.ne.s32.totalorder %s84, %s85
      %p94 = scmp.eq.s32.totalorder %s27, 0
      %p95 = por %p93, %p94
      %p96 = scmp.ne.s32.totalorder %s84, %s85
      %p97 = scmp.eq.s32.totalorder %s28, 1
      %p98 = por %p96, %p97
      %p100 = scmp.ne.s32.totalorder %s85, %s99
      %p101 = scmp.eq.s32.totalorder %s28, 0
      %p102 = por %p100, %p101
      %s104 = sadd.s32 %s103, 1
      %p107 = scmp.eq.s32.totalorder %s22, 1
      %p108 = scmp.ne.s32.totalorder %s103, %s105
      %p109 = scmp.eq.s32.totalorder %s22, 0
      %p110 = por %p108, %p109
      %p111 = scmp.ne.s32.totalorder %s103, %s105
      %p112 = scmp.eq.s32.totalorder %s27, 1
      %p113 = por %p111, %p112
      %p114 = scmp.ne.s32.totalorder %s105, %s106
      %p115 = scmp.eq.s32.totalorder %s27, 0
      %p116 = por %p114, %p115
      %p117 = scmp.ne.s32.totalorder %s105, %s106
      %p118 = scmp.eq.s32.totalorder %s28, 1
      %p119 = por %p117, %p118
      %p121 = scmp.ne.s32.totalorder %s106, %s120
      %p122 = scmp.eq.s32.totalorder %s28, 0
      %p123 = por %p121, %p122
      %s125 = sadd.s32 %s124, 1
      %p128 = scmp.eq.s32.totalorder %s22, 1
      %p129 = scmp.ne.s32.totalorder %s124, %s126
      %p130 = scmp.eq.s32.totalorder %s22, 0
      %p131 = por %p129, %p130
      %p132 = scmp.ne.s32.totalorder %s124, %s126
      %p133 = scmp.eq.s32.totalorder %s27, 1
      %p134 = por %p132, %p133
      %p135 = scmp.ne.s32.totalorder %s126, %s127
      %p136 = scmp.eq.s32.totalorder %s27, 0
      %p137 = por %p135, %p136
      %p138 = scmp.ne.s32.totalorder %s126, %s127
      %p139 = scmp.eq.s32.totalorder %s28, 1
      %p140 = por %p138, %p139
      %p142 = scmp.ne.s32.totalorder %s127, %s141
      %p143 = scmp.eq.s32.totalorder %s28, 0
      %p144 = por %p142, %p143
      %s146 = sadd.s32 %s145, 1
      %p149 = scmp.eq.s32.totalorder %s22, 1
      %p150 = scmp.ne.s32.totalorder %s145, %s147
      %p151 = scmp.eq.s32.totalorder %s22, 0
      %p152 = por %p150, %p151
      %p153 = scmp.ne.s32.totalorder %s145, %s147
      %p154 = scmp.eq.s32.totalorder %s27, 1
      %p155 = por %p153, %p154
      %p156 = scmp.ne.s32.totalorder %s147, %s148
      %p157 = scmp.eq.s32.totalorder %s27, 0
      %p158 = por %p156, %p157
      %p159 = scmp.ne.s32.totalorder %s147, %s148
      %p160 = scmp.eq.s32.totalorder %s28, 1
      %p161 = por %p159, %p160
      %p163 = scmp.ne.s32.totalorder %s148, %s162
      %p164 = scmp.eq.s32.totalorder %s28, 0
      %p165 = por %p163, %p164
      %s167 = sadd.s32 %s166, 1
      %p170 = scmp.eq.s32.totalorder %s22, 1
      %p171 = scmp.ne.s32.totalorder %s166, %s168
      %p172 = scmp.eq.s32.totalorder %s22, 0
      %p173 = por %p171, %p172
      %p174 = scmp.ne.s32.totalorder %s166, %s168
      %p175 = scmp.eq.s32.totalorder %s27, 1
      %p176 = por %p174, %p175
      %p177 = scmp.ne.s32.totalorder %s168, %s169
      %p178 = scmp.eq.s32.totalorder %s27, 0
      %p179 = por %p177, %p178
      %p180 = scmp.ne.s32.totalorder %s168, %s169
      %p181 = scmp.eq.s32.totalorder %s28, 1
      %p182 = por %p180, %p181
      %p184 = scmp.ne.s32.totalorder %s169, %s183
      %p185 = scmp.eq.s32.totalorder %s28, 0
      %p186 = por %p184, %p185
      %s187 = ssub.s32 %s22, %s29
      %p188 = scmp.eq.s32.totalorder %s187, 0
      %s190 = sadd.s32 %s189, 1
      %s191 = scalar_select %p188, %s189, %s190
      %p194 = pneg %p188
      %p195 = scmp.eq.s32.totalorder %s22, 1
      %p196 = por %p194, %p195
      %p197 = scmp.ne.s32.totalorder %s189, %s192
      %p198 = scmp.eq.s32.totalorder %s22, 0
      %p199 = por %p197, %p198
      %p200 = scmp.ne.s32.totalorder %s189, %s192
      %p201 = scmp.eq.s32.totalorder %s27, 1
      %p202 = por %p200, %p201
      %p203 = scmp.ne.s32.totalorder %s192, %s193
      %p204 = scmp.eq.s32.totalorder %s27, 0
      %p205 = por %p203, %p204
      %p206 = scmp.ne.s32.totalorder %s192, %s193
      %p207 = scmp.eq.s32.totalorder %s28, 1
      %p208 = por %p206, %p207
      %p210 = scmp.ne.s32.totalorder %s193, %s209
      %p211 = scmp.eq.s32.totalorder %s28, 0
      %p212 = por %p210, %p211
      %p213 = scmp.le.s32.totalorder 1, %s22
      %p214 = scmp.lt.s32.totalorder %s22, 3
      %p215 = pnand %p213, %p214
      %p216 = pneg %p215
      // Predicated region
      $region9: #{tpu_custom_call.1} parent=5 // pred_check
        _
      $region10: #{tpu_custom_call.1} parent=5 // pred_check_branch
        %218 = sbr.rel (%p215) target = $region12
      $region11: #{tpu_custom_call.1} parent=5 // pred_region
        %s219 = ssub.s32 %s22, 1
        // Predicated region
        $region13: #{tpu_custom_call.1} parent=11 // pred_check
          %p220 = pneg %p95
        $region14: #{tpu_custom_call.1} parent=11 // pred_check_branch
          %222 = sbr.rel (%p220) target = $region16
        $region15: #{tpu_custom_call.1} parent=11 // pred_region
          %s224 = ssub.s32 512, 512
          %225 = vsyncadd [#allocation6], %s224
          %s226 = sshll.u32 [#allocation7], 4
          %s227 = int_to_ptr.vmem [resolvable:$true] %s226
          %232 = dma.hbm_to_vmem [thread:$0]  %s2, 512, %s227, [#allocation6], 256, 256, 16
        $region16: #{tpu_custom_call.1} parent=11 // pred_fallthru
          _
        // Predicated region
        $region17: #{tpu_custom_call.1} parent=11 // pred_check
          %p233 = pneg %p116
        $region18: #{tpu_custom_call.1} parent=11 // pred_check_branch
          %235 = sbr.rel (%p233) target = $region20
        $region19: #{tpu_custom_call.1} parent=11 // pred_region
          _
        $region20: #{tpu_custom_call.1} parent=11 // pred_fallthru
          _
        // Predicated region
        $region21: #{tpu_custom_call.1} parent=11 // pred_check
          %p236 = pneg %p137
        $region22: #{tpu_custom_call.1} parent=11 // pred_check_branch
          %238 = sbr.rel (%p236) target = $region24
        $region23: #{tpu_custom_call.1} parent=11 // pred_region
          _
        $region24: #{tpu_custom_call.1} parent=11 // pred_fallthru
          _
        // Predicated region
        $region25: #{tpu_custom_call.1} parent=11 // pred_check
          %p239 = pneg %p158
        $region26: #{tpu_custom_call.1} parent=11 // pred_check_branch
          %241 = sbr.rel (%p239) target = $region28
        $region27: #{tpu_custom_call.1} parent=11 // pred_region
          _
        $region28: #{tpu_custom_call.1} parent=11 // pred_fallthru
          _
        // Predicated region
        $region29: #{tpu_custom_call.1} parent=11 // pred_check
          %p242 = pneg %p179
        $region30: #{tpu_custom_call.1} parent=11 // pred_check_branch
          %244 = sbr.rel (%p242) target = $region32
        $region31: #{tpu_custom_call.1} parent=11 // pred_region
          _
        $region32: #{tpu_custom_call.1} parent=11 // pred_fallthru
          _
      $region12: #{tpu_custom_call.1} parent=5 // pred_fallthru
        _
      %p245 = scmp.lt.s32.totalorder %s22, 2
      // Predicated region
      $region33: #{tpu_custom_call.1} parent=5 // pred_check
        %p246 = pneg %p245
      $region34: #{tpu_custom_call.1} parent=5 // pred_check_branch
        %248 = sbr.rel (%p246) target = $region36
      $region35: #{tpu_custom_call.1} parent=5 // pred_region
        // Predicated region
        $region37: #{tpu_custom_call.1} parent=35 // pred_check
          %p249 = pneg %p42
        $region38: #{tpu_custom_call.1} parent=35 // pred_check_branch
          %251 = sbr.rel (%p249) target = $region40
        $region39: #{tpu_custom_call.1} parent=35 // pred_region
          %s252 = sand.u32 %s32, 1
          %s253 = scalar_lea.sflag [#allocation3], %s252
          %s254 = sand.u32 %s32, 1
          %s255 = smul.addr %s254, 16
          %s256 = scalar_lea.vmem [#allocation2], %s255
          %s258 = ssub.s32 256, 256
          %259 = vsyncadd %s253, %s258
          %s260 = smul.addr %s22, 2
          %s261 = smul.addr %s260, 128
          %s262 = scalar_lea.hbm %s0, %s261
          %s264 = sshll.u32 %s256, 4
          %s265 = int_to_ptr.vmem [resolvable:$true] %s264
          %267 = dma.hbm_to_vmem [thread:$0]  %s262, 256, %s265, %s253
        $region40: #{tpu_custom_call.1} parent=35 // pred_fallthru
          _
        // Predicated region
        $region41: #{tpu_custom_call.1} parent=35 // pred_check
          %p268 = pneg %p68
        $region42: #{tpu_custom_call.1} parent=35 // pred_check_branch
          %270 = sbr.rel (%p268) target = $region44
        $region43: #{tpu_custom_call.1} parent=35 // pred_region
          %s271 = sand.u32 %s22, 1
          %s272 = scalar_lea.sflag [#allocation6], %s271
          %s273 = sand.u32 %s58, 1
          %s274 = smul.addr %s273, 16
          %s275 = scalar_lea.vmem [#allocation5], %s274
          %s277 = ssub.s32 256, 256
          %278 = vsyncadd %s272, %s277
          %s279 = smul.addr %s22, 2
          %s280 = smul.addr %s279, 128
          %s281 = scalar_lea.hbm %s1, %s280
          %s283 = sshll.u32 %s275, 4
          %s284 = int_to_ptr.vmem [resolvable:$true] %s283
          %286 = dma.hbm_to_vmem [thread:$0]  %s281, 256, %s284, %s272
        $region44: #{tpu_custom_call.1} parent=35 // pred_fallthru
          _
      $region36: #{tpu_custom_call.1} parent=5 // pred_fallthru
        _
      %p287 = scmp.le.s32.totalorder 1, %s22
      %p288 = scmp.lt.s32.totalorder %s22, 3
      %p289 = pnand %p287, %p288
      %p290 = pneg %p289
      // Predicated region
      $region45: #{tpu_custom_call.1} parent=5 // pred_check
        _
      $region46: #{tpu_custom_call.1} parent=5 // pred_check_branch
        %292 = sbr.rel (%p289) target = $region48
      $region47: #{tpu_custom_call.1} parent=5 // pred_region
        %s293 = ssub.s32 %s22, 1
        %s294 = sand.u32 %s35, 1
        %s295 = scalar_lea.sflag [#allocation3], %s294
        %s296 = sand.u32 %s35, 1
        %s297 = smul.addr %s296, 16
        %s298 = scalar_lea.vmem [#allocation2], %s297
        // Predicated region
        $region49: #{tpu_custom_call.1} parent=47 // pred_check
          %p299 = pneg %p48
        $region50: #{tpu_custom_call.1} parent=47 // pred_check_branch
          %301 = sbr.rel (%p299) target = $region52
        $region51: #{tpu_custom_call.1} parent=47 // pred_region
          %302 = dma.done %s295, 256
        $region52: #{tpu_custom_call.1} parent=47 // pred_fallthru
          _
        %s303 = sand.u32 %s27, 1
        %s304 = scalar_lea.sflag [#allocation6], %s303
        %s305 = sand.u32 %s61, 1
        %s306 = smul.addr %s305, 16
        %s307 = scalar_lea.vmem [#allocation5], %s306
        // Predicated region
        $region53: #{tpu_custom_call.1} parent=47 // pred_check
          %p308 = pneg %p74
        $region54: #{tpu_custom_call.1} parent=47 // pred_check_branch
          %310 = sbr.rel (%p308) target = $region56
        $region55: #{tpu_custom_call.1} parent=47 // pred_region
          %311 = dma.done %s304, 256
        $region56: #{tpu_custom_call.1} parent=47 // pred_fallthru
          _
        // Predicated region
        $region57: #{tpu_custom_call.1} parent=47 // pred_check
          %p312 = pneg %p95
        $region58: #{tpu_custom_call.1} parent=47 // pred_check_branch
          %314 = sbr.rel (%p312) target = $region60
        $region59: #{tpu_custom_call.1} parent=47 // pred_region
          %315 = dma.done [#allocation6], 512
        $region60: #{tpu_custom_call.1} parent=47 // pred_fallthru
          _
        %s316 = sand.u32 %s35, 1
        %s317 = scalar_lea.sflag [#allocation3], %s316
        %s318 = sand.u32 %s35, 1
        %s319 = smul.addr %s318, 16
        %s320 = scalar_lea.vmem [#allocation2], %s319
        %p321 = pneg %p48
        %p322 = pneg %p45
        %s323 = sand.u32 %s27, 1
        %s324 = scalar_lea.sflag [#allocation6], %s323
        %s325 = sand.u32 %s61, 1
        %s326 = smul.addr %s325, 16
        %s327 = scalar_lea.vmem [#allocation5], %s326
        %p328 = pneg %p74
        %p329 = pneg %p71
        %p330 = pneg %p95
        %p331 = pneg %p92
        %p332 = pneg %p116
        %p333 = pneg %p113
        %p334 = pneg %p137
        %p335 = pneg %p134
        %p336 = pneg %p158
        %p337 = pneg %p155
        %p338 = pneg %p179
        %p339 = pneg %p176
        %p340 = pneg %p205
        %p341 = pneg %p202
        %s342 = sand.u32 %s192, 1
        %s343 = scalar_lea.sflag [#allocation4], %s342
        %s344 = sand.u32 %s192, 1
        %s345 = smul.addr %s344, 8
        %s346 = scalar_lea.vmem [#allocation8], %s345
        %v347 = vld [vmem:[%s307] sm:$0xff]
        %v348 = vld [vmem:[%s307 + $0x8] sm:$0xff]
        %v349 = vld [vmem:[%s298] sm:$0xff]
        %v350 = vld [vmem:[%s298 + $0x8] sm:$0xff]
        %v351 = vld [vmem:[#allocation7] sm:$0xff]
        %v352 = vld [vmem:[#allocation7 + $0x8] sm:$0xff]
        %v353 = vld [vmem:[#allocation7 + $0x10] sm:$0x1]
        %v354 = vld [vmem:[#allocation7 + $0x18] sm:$0x1]
        %v355 = vmul.f32 %v347, %v349
        %v356 = vmul.f32 %v348, %v350
        %v357 = vld [vmem:[%s3] sm:$0xff]
        %359 = vrot.lane.b32.xlu0 %v356, 17
        %v360 = vpop.permute.xlu0 %359
        %363 = vrot.lane.b32.xlu0 %v355, 17
        %v364 = vpop.permute.xlu0 %363
        %vm365 = vcmask 138240
        %v366 = vsel %vm365, %v364, %v360
        %v369 = vsel %vm365, %v360, %v364
        %v370 = vlaneseq
        %v371 = vshrl.u32 %v370, 7
        %v372 = vsub.s32 0, %v371
        %v373 = vrot.slane %v351, %v372
        %v374 = vlaneseq
        %v375 = vshrl.u32 %v374, 7
        %v376 = vsub.s32 0, %v375
        %v377 = vrot.slane %v352, %v376
        %v378 = vmul.f32 %v369, %v373
        %v379 = vmul.f32 %v366, %v377
        %380 = vrot.lane.b32.xlu0 %v356, 16
        %v381 = vpop.permute.xlu0 %380
        %383 = vrot.lane.b32.xlu0 %v355, 16
        %v384 = vpop.permute.xlu0 %383
        %vm385 = vcmask 130048
        %v386 = vsel %vm385, %v384, %v381
        %v389 = vsel %vm385, %v381, %v384
        %v390 = vlaneseq
        %v391 = vshrl.u32 %v390, 7
        %v392 = vsub.s32 1, %v391
        %v393 = vrot.slane %v351, %v392
        %v394 = vlaneseq
        %v395 = vshrl.u32 %v394, 7
        %v396 = vsub.s32 1, %v395
        %v397 = vrot.slane %v352, %v396
        %v398 = vmul.f32 %v389, %v393
        %v399 = vmul.f32 %v386, %v397
        %400 = vrot.lane.b32.xlu0 %v356, 15
        %v401 = vpop.permute.xlu0 %400
        %403 = vrot.lane.b32.xlu0 %v355, 15
        %v404 = vpop.permute.xlu0 %403
        %vm405 = vcmask 121856
        %v406 = vsel %vm405, %v404, %v401
        %v409 = vsel %vm405, %v401, %v404
        %v410 = vlaneseq
        %v411 = vshrl.u32 %v410, 7
        %v412 = vsub.s32 2, %v411
        %v413 = vrot.slane %v351, %v412
        %v414 = vlaneseq
        %v415 = vshrl.u32 %v414, 7
        %v416 = vsub.s32 2, %v415
        %v417 = vrot.slane %v352, %v416
        %v418 = vmul.f32 %v409, %v413
        %v419 = vmul.f32 %v406, %v417
        %420 = vrot.lane.b32.xlu0 %v356, 1
        %v421 = vpop.permute.xlu0 %420
        %423 = vrot.lane.b32.xlu0 %v355, 1
        %v424 = vpop.permute.xlu0 %423
        %vm425 = vcmask 7168
        %v426 = vsel %vm425, %v424, %v421
        %v429 = vsel %vm425, %v421, %v424
        %v430 = vlaneseq
        %v431 = vshrl.u32 %v430, 7
        %v432 = vsub.s32 3, %v431
        %v433 = vrot.slane %v351, %v432
        %v434 = vlaneseq
        %v435 = vshrl.u32 %v434, 7
        %v436 = vsub.s32 3, %v435
        %v437 = vrot.slane %v352, %v436
        %v438 = vmul.f32 %v429, %v433
        %v439 = vmul.f32 %v426, %v437
        %440 = vrot.lane.b32.xlu0 %v355, 127
        %v441 = vpop.permute.xlu0 %440
        %442 = vrot.lane.b32.xlu0 %v356, 127
        %v443 = vpop.permute.xlu0 %442
        %vm444 = vcmask 1039360
        %v445 = vsel %vm444, %v441, %v443
        %v449 = vsel %vm444, %v443, %v441
        %v450 = vlaneseq
        %v451 = vshrl.u32 %v450, 7
        %v452 = vsub.s32 5, %v451
        %v453 = vrot.slane %v351, %v452
        %v454 = vlaneseq
        %v455 = vshrl.u32 %v454, 7
        %v456 = vsub.s32 5, %v455
        %v457 = vrot.slane %v352, %v456
        %v458 = vmul.f32 %v445, %v453
        %v459 = vmul.f32 %v449, %v457
        %460 = vrot.lane.b32.xlu0 %v355, 113
        %v461 = vpop.permute.xlu0 %460
        %462 = vrot.lane.b32.xlu0 %v356, 113
        %v463 = vpop.permute.xlu0 %462
        %vm464 = vcmask 924672
        %v465 = vsel %vm464, %v461, %v463
        %v469 = vsel %vm464, %v463, %v461
        %v470 = vlaneseq
        %v471 = vshrl.u32 %v470, 7
        %v472 = vsub.s32 6, %v471
        %v473 = vrot.slane %v351, %v472
        %v474 = vlaneseq
        %v475 = vshrl.u32 %v474, 7
        %v476 = vsub.s32 6, %v475
        %v477 = vrot.slane %v352, %v476
        %v478 = vmul.f32 %v465, %v473
        %v479 = vmul.f32 %v469, %v477
        %480 = vrot.lane.b32.xlu0 %v355, 112
        %v481 = vpop.permute.xlu0 %480
        %482 = vrot.lane.b32.xlu0 %v356, 112
        %v483 = vpop.permute.xlu0 %482
        %vm484 = vcmask 916480
        %v485 = vsel %vm484, %v481, %v483
        %v489 = vsel %vm484, %v483, %v481
        %v490 = vlaneseq
        %v491 = vshrl.u32 %v490, 7
        %v492 = vsub.s32 7, %v491
        %v493 = vrot.slane %v351, %v492
        %v494 = vlaneseq
        %v495 = vshrl.u32 %v494, 7
        %v496 = vsub.s32 7, %v495
        %v497 = vrot.slane %v352, %v496
        %v498 = vmul.f32 %v485, %v493
        %v499 = vmul.f32 %v489, %v497
        %500 = vrot.lane.b32.xlu0 %v355, 111
        %v501 = vpop.permute.xlu0 %500
        %502 = vrot.lane.b32.xlu0 %v356, 111
        %v503 = vpop.permute.xlu0 %502
        %vm504 = vcmask 908288
        %v505 = vsel %vm504, %v501, %v503
        %v509 = vsel %vm504, %v503, %v501
        %v510 = vlaneseq
        %v511 = vshrl.u32 %v510, 7
        %v512 = vsub.s32 0, %v511
        %v513 = vrot.slane %v353, %v512
        %v514 = vlaneseq
        %v515 = vshrl.u32 %v514, 7
        %v516 = vsub.s32 0, %v515
        %v517 = vrot.slane %v354, %v516
        %v518 = vmul.f32 %v505, %v513
        %v519 = vmul.f32 %v509, %v517
        %v520 = vld [vmem:[%s4] sm:$0xff]
        %522 = vset.pattern.permute.xlu0 0
        %523 = vperm.xlu0 %522, %v520
        %v524 = vpop.permute.xlu0 %523
        %vm526 = vcmask 588800
        %v528 = vsel %vm526, %v357, 0
        %530 = vmatprep.subr.mxu0 %v379
        %531 = vmatpush1.msra.mxu0 %v378
        %532 = vmatprep.subr.mxu0 %v399
        %533 = vmatpush1.msra.mxu0 %v398
        %534 = vmatprep.subr.mxu0 %v419
        %535 = vmatpush1.msra.mxu0 %v418
        %536 = vmatprep.subr.mxu0 %v439
        %537 = vmatpush1.msra.mxu0 %v438
        %538 = vmatprep.subr.mxu0 %v356
        %539 = vmatpush1.msra.mxu0 %v355
        %540 = vmatprep.subr.mxu0 %v459
        %541 = vmatpush1.msra.mxu0 %v458
        %542 = vmatprep.subr.mxu0 %v479
        %543 = vmatpush1.msra.mxu0 %v478
        %544 = vmatprep.subr.mxu0 %v499
        %545 = vmatpush1.msra.mxu0 %v498
        %546 = vmatprep.subr.mxu0 %v519
        %547 = vmatpush1.msra.mxu0 %v518
        %548 = vmatprep.subr.mxu0 0.0
        %549 = vmatpush1.msra.mxu0 0.0
        %550 = vmatprep.subr.mxu0 0.0
        %551 = vmatpush1.msra.mxu0 0.0
        %552 = vmatprep.subr.mxu0 0.0
        %553 = vmatpush1.msra.mxu0 0.0
        %554 = vmatprep.subr.mxu0 0.0
        %555 = vmatpush1.msra.mxu0 0.0
        %556 = vmatprep.subr.mxu0 0.0
        %557 = vmatpush1.msra.mxu0 0.0
        %558 = vmatprep.subr.mxu0 0.0
        %559 = vmatpush1.msra.mxu0 0.0
        %560 = vmatprep.subr.mxu0 0.0
        %561 = vmatpush1.msra.mxu0 0.0
        %562 = vmatprep.subr.mxu0 0.0
        %563 = vmatpush1.msra.mxu0 0.0
        %564 = vmatprep.subr.mxu0 0.0
        %565 = vmatpush1.msra.mxu0 0.0
        %566 = vmatprep.subr.mxu0 0.0
        %567 = vmatpush1.msra.mxu0 0.0
        %568 = vmatprep.subr.mxu0 0.0
        %569 = vmatpush1.msra.mxu0 0.0
        %570 = vmatprep.subr.mxu0 0.0
        %571 = vmatpush1.msra.mxu0 0.0
        %572 = vmatprep.subr.mxu0 0.0
        %573 = vmatpush1.msra.mxu0 0.0
        %574 = vmatprep.subr.mxu0 0.0
        %575 = vmatpush1.msra.mxu0 0.0
        %576 = vmatprep.subr.mxu0 0.0
        %577 = vmatpush1.msra.mxu0 0.0
        %578 = vmatprep.subr.mxu0 0.0
        %579 = vmatpush1.msra.mxu0 0.0
        %580 = vmatprep.subr.mxu0 0.0
        %581 = vmatpush1.msra.mxu0 0.0
        %582 = vmatprep.subr.mxu0 0.0
        %583 = vmatpush1.msra.mxu0 0.0
        %584 = vmatprep.subr.mxu0 0.0
        %585 = vmatpush1.msra.mxu0 0.0
        %586 = vmatprep.subr.mxu0 0.0
        %587 = vmatpush1.msra.mxu0 0.0
        %588 = vmatprep.subr.mxu0 0.0
        %589 = vmatpush1.msra.mxu0 0.0
        %590 = vmatprep.subr.mxu0 0.0
        %591 = vmatpush1.msra.mxu0 0.0
        %592 = vmatprep.subr.mxu0 0.0
        %593 = vmatpush1.msra.mxu0 0.0
        %594 = vmatprep.mubr.f32.mxu0 0.0
        %595 = vmatmul.mubr.f32.gmra.mrb[0].mxu0 %v528
        %v596 = vpop.f32.mrb[0].mxu0
        %v597 = vadd.f32 %v524, %v596
        %v598 = vpop.f32.mrb[0].mxu0
        %v599 = vadd.f32 %v524, %v598
        %600 = vdwg.mxu0
        %v601 = vmul.f32 %v597, 0.2
        %v602 = vmul.f32 %v599, 0.2
        %v603 = vmax.f32 %v597, %v601
        %v604 = vmax.f32 %v599, %v602
        %v605 = vld [vmem:[%s5] sm:$0xf]
        %607 = vrot.lane.b32.xlu0 %v604, 17
        %v608 = vpop.permute.xlu0 %607
        %611 = vrot.lane.b32.xlu0 %v603, 17
        %v612 = vpop.permute.xlu0 %611
        %v613 = vsel %vm365, %v612, %v608
        %v616 = vsel %vm365, %v608, %v612
        %v617 = vmul.f32 %v616, %v373
        %v618 = vmul.f32 %v613, %v377
        %619 = vrot.lane.b32.xlu0 %v604, 16
        %v620 = vpop.permute.xlu0 %619
        %622 = vrot.lane.b32.xlu0 %v603, 16
        %v623 = vpop.permute.xlu0 %622
        %v624 = vsel %vm385, %v623, %v620
        %v627 = vsel %vm385, %v620, %v623
        %v628 = vmul.f32 %v627, %v393
        %v629 = vmul.f32 %v624, %v397
        %630 = vrot.lane.b32.xlu0 %v604, 15
        %v631 = vpop.permute.xlu0 %630
        %633 = vrot.lane.b32.xlu0 %v603, 15
        %v634 = vpop.permute.xlu0 %633
        %v635 = vsel %vm405, %v634, %v631
        %v638 = vsel %vm405, %v631, %v634
        %v639 = vmul.f32 %v638, %v413
        %v640 = vmul.f32 %v635, %v417
        %641 = vrot.lane.b32.xlu0 %v604, 1
        %v642 = vpop.permute.xlu0 %641
        %644 = vrot.lane.b32.xlu0 %v603, 1
        %v645 = vpop.permute.xlu0 %644
        %v646 = vsel %vm425, %v645, %v642
        %v649 = vsel %vm425, %v642, %v645
        %v650 = vmul.f32 %v649, %v433
        %v651 = vmul.f32 %v646, %v437
        %652 = vrot.lane.b32.xlu0 %v603, 127
        %v653 = vpop.permute.xlu0 %652
        %654 = vrot.lane.b32.xlu0 %v604, 127
        %v655 = vpop.permute.xlu0 %654
        %v656 = vsel %vm444, %v653, %v655
        %v660 = vsel %vm444, %v655, %v653
        %v661 = vmul.f32 %v656, %v453
        %v662 = vmul.f32 %v660, %v457
        %663 = vrot.lane.b32.xlu0 %v603, 113
        %v664 = vpop.permute.xlu0 %663
        %665 = vrot.lane.b32.xlu0 %v604, 113
        %v666 = vpop.permute.xlu0 %665
        %v667 = vsel %vm464, %v664, %v666
        %v671 = vsel %vm464, %v666, %v664
        %v672 = vmul.f32 %v667, %v473
        %v673 = vmul.f32 %v671, %v477
        %674 = vrot.lane.b32.xlu0 %v603, 112
        %v675 = vpop.permute.xlu0 %674
        %676 = vrot.lane.b32.xlu0 %v604, 112
        %v677 = vpop.permute.xlu0 %676
        %v678 = vsel %vm484, %v675, %v677
        %v682 = vsel %vm484, %v677, %v675
        %v683 = vmul.f32 %v678, %v493
        %v684 = vmul.f32 %v682, %v497
        %685 = vrot.lane.b32.xlu0 %v603, 111
        %v686 = vpop.permute.xlu0 %685
        %687 = vrot.lane.b32.xlu0 %v604, 111
        %v688 = vpop.permute.xlu0 %687
        %v689 = vsel %vm504, %v686, %v688
        %v693 = vsel %vm504, %v688, %v686
        %v694 = vmul.f32 %v689, %v513
        %v695 = vmul.f32 %v693, %v517
        %v696 = vld [vmem:[%s6] sm:$0xf]
        %698 = vset.pattern.permute.xlu0 0
        %699 = vperm.xlu0 %698, %v696
        %v700 = vpop.permute.xlu0 %699
        %v703 = vsel %vm526, %v605, 0
        %705 = vmatprep.subr.mxu0 %v618
        %706 = vmatpush1.msra.mxu0 %v617
        %707 = vmatprep.subr.mxu0 %v629
        %708 = vmatpush1.msra.mxu0 %v628
        %709 = vmatprep.subr.mxu0 %v640
        %710 = vmatpush1.msra.mxu0 %v639
        %711 = vmatprep.subr.mxu0 %v651
        %712 = vmatpush1.msra.mxu0 %v650
        %713 = vmatprep.subr.mxu0 %v604
        %714 = vmatpush1.msra.mxu0 %v603
        %715 = vmatprep.subr.mxu0 %v662
        %716 = vmatpush1.msra.mxu0 %v661
        %717 = vmatprep.subr.mxu0 %v673
        %718 = vmatpush1.msra.mxu0 %v672
        %719 = vmatprep.subr.mxu0 %v684
        %720 = vmatpush1.msra.mxu0 %v683
        %721 = vmatprep.subr.mxu0 %v695
        %722 = vmatpush1.msra.mxu0 %v694
        %723 = vmatprep.subr.mxu0 0.0
        %724 = vmatpush1.msra.mxu0 0.0
        %725 = vmatprep.subr.mxu0 0.0
        %726 = vmatpush1.msra.mxu0 0.0
        %727 = vmatprep.subr.mxu0 0.0
        %728 = vmatpush1.msra.mxu0 0.0
        %729 = vmatprep.subr.mxu0 0.0
        %730 = vmatpush1.msra.mxu0 0.0
        %731 = vmatprep.subr.mxu0 0.0
        %732 = vmatpush1.msra.mxu0 0.0
        %733 = vmatprep.subr.mxu0 0.0
        %734 = vmatpush1.msra.mxu0 0.0
        %735 = vmatprep.subr.mxu0 0.0
        %736 = vmatpush1.msra.mxu0 0.0
        %737 = vmatprep.subr.mxu0 0.0
        %738 = vmatpush1.msra.mxu0 0.0
        %739 = vmatprep.subr.mxu0 0.0
        %740 = vmatpush1.msra.mxu0 0.0
        %741 = vmatprep.subr.mxu0 0.0
        %742 = vmatpush1.msra.mxu0 0.0
        %743 = vmatprep.subr.mxu0 0.0
        %744 = vmatpush1.msra.mxu0 0.0
        %745 = vmatprep.subr.mxu0 0.0
        %746 = vmatpush1.msra.mxu0 0.0
        %747 = vmatprep.subr.mxu0 0.0
        %748 = vmatpush1.msra.mxu0 0.0
        %749 = vmatprep.subr.mxu0 0.0
        %750 = vmatpush1.msra.mxu0 0.0
        %751 = vmatprep.subr.mxu0 0.0
        %752 = vmatpush1.msra.mxu0 0.0
        %753 = vmatprep.subr.mxu0 0.0
        %754 = vmatpush1.msra.mxu0 0.0
        %755 = vmatprep.subr.mxu0 0.0
        %756 = vmatpush1.msra.mxu0 0.0
        %757 = vmatprep.subr.mxu0 0.0
        %758 = vmatpush1.msra.mxu0 0.0
        %759 = vmatprep.subr.mxu0 0.0
        %760 = vmatpush1.msra.mxu0 0.0
        %761 = vmatprep.subr.mxu0 0.0
        %762 = vmatpush1.msra.mxu0 0.0
        %763 = vmatprep.subr.mxu0 0.0
        %764 = vmatpush1.msra.mxu0 0.0
        %765 = vmatprep.subr.mxu0 0.0
        %766 = vmatpush1.msra.mxu0 0.0
        %767 = vmatprep.subr.mxu0 0.0
        %768 = vmatpush1.msra.mxu0 0.0
        %769 = vmatprep.mubr.f32.mxu0 0.0
        %770 = vmatmul.mubr.f32.gmra.mrb[0].mxu0 %v703
        %v771 = vpop.f32.mrb[0].mxu0
        %v772 = vadd.f32 %v700, %v771
        %v773 = vpop.f32.mrb[0].mxu0
        %v774 = vadd.f32 %v700, %v773
        %775 = vdwg.mxu0
        %v776 = vsub.f32 0.0, %v772
        %v777 = vsub.f32 0.0, %v774
        %v778 = vmul.f32 %v776, 1.442695
        %v779 = vpow.pop %v778
        %v780 = vmul.f32 %v777, 1.442695
        %v781 = vpow.pop %v780
        %v782 = vadd.f32 %v779, 1.0
        %v783 = vadd.f32 %v781, 1.0
        %v784 = vrcp.pop %v782
        %v785 = vmul.f32 1.0, %v784
        %v786 = vrcp.pop %v783
        %v787 = vmul.f32 1.0, %v786
        %v790 = vcombine.low %v785, %v787
        %792 = vst [vmem:[%s346] sm:$0xff] %v790
        %s793 = sand.u32 %s192, 1
        %s794 = scalar_lea.sflag [#allocation4], %s793
        %s795 = sand.u32 %s192, 1
        %s796 = smul.addr %s795, 8
        %s797 = scalar_lea.vmem [#allocation8], %s796
        // Predicated region
        $region61: #{tpu_custom_call.1} parent=47 // pred_check
          %p798 = pneg %p202
        $region62: #{tpu_custom_call.1} parent=47 // pred_check_branch
          %800 = sbr.rel (%p798) target = $region64
        $region63: #{tpu_custom_call.1} parent=47 // pred_region
          %s802 = ssub.s32 128, 128
          %803 = vsyncadd %s794, %s802
          %s804 = smul.addr %s27, 2
          %s805 = smul.addr %s804, 64
          %s806 = scalar_lea.hbm %s7, %s805
          %s808 = sshll.u32 %s797, 4
          %s809 = int_to_ptr.vmem [resolvable:$true] %s808
          %811 = dma.vmem_to_hbm [thread:$0]  %s809, 128, %s806, %s794
        $region64: #{tpu_custom_call.1} parent=47 // pred_fallthru
          _
      $region48: #{tpu_custom_call.1} parent=5 // pred_fallthru
        _
      %p812 = scmp.le.s32.totalorder 2, %s22
      // Predicated region
      $region65: #{tpu_custom_call.1} parent=5 // pred_check
        %p813 = pneg %p812
      $region66: #{tpu_custom_call.1} parent=5 // pred_check_branch
        %815 = sbr.rel (%p813) target = $region68
      $region67: #{tpu_custom_call.1} parent=5 // pred_region
        %s816 = ssub.s32 %s22, 2
        // Predicated region
        $region69: #{tpu_custom_call.1} parent=67 // pred_check
          %p817 = pneg %p208
        $region70: #{tpu_custom_call.1} parent=67 // pred_check_branch
          %819 = sbr.rel (%p817) target = $region72
        $region71: #{tpu_custom_call.1} parent=67 // pred_region
          %s820 = sand.u32 %s193, 1
          %s821 = scalar_lea.sflag [#allocation4], %s820
          %s822 = sand.u32 %s193, 1
          %s823 = smul.addr %s822, 8
          %s824 = scalar_lea.vmem [#allocation8], %s823
          %825 = dma.done %s821, 128
        $region72: #{tpu_custom_call.1} parent=67 // pred_fallthru
          _
      $region68: #{tpu_custom_call.1} parent=5 // pred_fallthru
        _
    $region6: #{tpu_custom_call.1} parent=1 // loop_footer
      %s26 = sadd.s32 1, %s22
    $region7: #{tpu_custom_call.1} parent=1 // loop_footer_branch
      %21 = sbr.rel target = $region3
    $region8: #{tpu_custom_call.1} parent=1 // loop_exit
      _
    %826 = vsyncpa [#allocation3], 1
    %s827 = scalar_lea.sflag [#allocation3], 1
    %828 = vsyncpa %s827, 1
    %829 = vsyncpa [#allocation6], 1
    %s830 = scalar_lea.sflag [#allocation6], 1
    %831 = vsyncpa %s830, 1
    %832 = vsyncpa [#allocation4], 1
    %s833 = scalar_lea.sflag [#allocation4], 1
    %834 = vsyncpa %s833, 1

</llo_original>
